<compile_context>
chip_gen: v5e
topology: v5e:2x2
jax: 0.10.0
libtpu: 0.0.40
codegen_flags: <defaults>
</compile_context>

<pallas_src>
import functools

import jax
import jax.numpy as jnp
from jax.experimental import pallas as pl
from jax.experimental.pallas import tpu as pltpu

_EPS = 1e-6  # torch.nn.functional.pairwise_distance default eps
_NUM_CORES = 2  # 2-TC split: ~2x on v7x, harmless sequential loop on v5e/v6e


def _triplet_loss_kernel(margin_ref, a_ref, p_ref, n_ref, o_ref, *,
                         batch, block_rows, blocks_per_core,
                         first_padded_block, needs_mask):
    c = pl.program_id(0)   # core ("parallel") axis
    i = pl.program_id(1)   # per-core reduction ("arbitrary") axis

    @pl.when(i == 0)
    def _():
        o_ref[...] = jnp.zeros_like(o_ref)

    a = a_ref[...].astype(jnp.float32)
    p = p_ref[...].astype(jnp.float32)
    n = n_ref[...].astype(jnp.float32)

    # pairwise_distance: eps is added to the difference before the norm.
    dpos = jnp.sqrt(jnp.sum((a - p + _EPS) ** 2, axis=-1, keepdims=True))  # (TB, 1)
    dneg = jnp.sqrt(jnp.sum((a - n + _EPS) ** 2, axis=-1, keepdims=True))  # (TB, 1)

    margin = margin_ref[0]
    losses = jnp.maximum(dpos - dneg + margin, 0.0)  # relu, (TB, 1)

    # Global (unclamped) row-block index handled at this step.
    gb = c * blocks_per_core + i

    if needs_mask:
        # Steady-state blocks: no mask work at all.
        @pl.when(gb < first_padded_block)
        def _():
            o_ref[...] += jnp.sum(losses)

        # Ragged final block and/or fully padded per-core blocks.
        @pl.when(gb >= first_padded_block)
        def _():
            row = gb * block_rows + jax.lax.broadcasted_iota(
                jnp.int32, losses.shape, 0)
            masked = jnp.where(row < batch, losses, 0.0)  # select, not multiply
            o_ref[...] += jnp.sum(masked)
    else:
        o_ref[...] += jnp.sum(losses)


def _vmem_budget_and_limit():
    """Per-generation (budget for 3 double-buffered inputs, vmem_limit_bytes)."""
    mib = 1024 * 1024
    try:
        cap = getattr(pltpu.get_tpu_info(), "vmem_capacity_bytes", None)
    except Exception:  # pragma: no cover - conservative fallback off-TPU etc.
        cap = None
    if cap is None:
        return 12 * mib, None          # safe under v5e's 16 MiB default scope
    if cap >= 100 * mib:               # v5e / v6e: 128 MiB physical per TC
        return 48 * mib, 64 * mib
    if cap >= 48 * mib:                # v7x: 64 MiB physical per TC
        return 24 * mib, None          # stay inside the 32 MiB default scope
    return 12 * mib, None


def _pick_block_rows(batch, feat, itemsize, vmem_budget_bytes, num_cores):
    """Largest sublane-aligned batch tile whose 3 double-buffered input blocks
    fit the VMEM budget, capped so both cores get work on large batches."""
    sublane = max(8, 32 // max(itemsize, 1))   # f32: 8, bf16: 16, int8/fp8: 32
    per_row_bytes = 3 * 2 * feat * itemsize    # 3 inputs x 2 pipeline buffers
    tb = max(sublane, vmem_budget_bytes // max(per_row_bytes, 1))
    per_core = -(-batch // num_cores)                      # cdiv
    per_core = -(-per_core // sublane) * sublane           # round up to sublane
    tb = min(tb, per_core)
    if tb >= batch:
        return batch  # single full-extent block (no divisibility needed)
    return int(max(sublane, (tb // sublane) * sublane))


def triplet_loss(anchor, positive, negative, margin=1.0, block_rows=None):
    """Pallas TPU implementation of TripletLoss.forward. Returns a scalar."""
    assert anchor.shape == positive.shape == negative.shape
    assert anchor.ndim == 2, "expects (batch, feature) embeddings"
    B, D = anchor.shape

    itemsize = jnp.dtype(anchor.dtype).itemsize
    vmem_budget, vmem_limit = _vmem_budget_and_limit()
    if block_rows is None:
        block_rows = _pick_block_rows(B, D, itemsize, vmem_budget, _NUM_CORES)
    block_rows = int(min(block_rows, B))

    nb = pl.cdiv(B, block_rows)                 # number of real row blocks
    blocks_per_core = pl.cdiv(nb, _NUM_CORES)
    nb_padded = blocks_per_core * _NUM_CORES
    ragged = (B % block_rows) != 0
    first_padded_block = (B // block_rows) if ragged else nb
    needs_mask = ragged or (nb_padded != nb)

    margin_arr = jnp.full((1,), margin, dtype=jnp.float32)

    kernel = functools.partial(
        _triplet_loss_kernel, batch=B, block_rows=block_rows,
        blocks_per_core=blocks_per_core,
        first_padded_block=first_padded_block, needs_mask=needs_mask)

    def row_index_map(c, i):
        # Clamp so fully padded per-core blocks re-read the last valid block
        # (their contribution is masked to zero in-kernel).
        return (jnp.minimum(c * blocks_per_core + i, nb - 1), 0)

    row_spec = pl.BlockSpec((block_rows, D), row_index_map)

    out = pl.pallas_call(
        kernel,
        out_shape=jax.ShapeDtypeStruct((_NUM_CORES, 8, 128), jnp.float32),
        grid_spec=pltpu.PrefetchScalarGridSpec(
            num_scalar_prefetch=0,
            grid=(_NUM_CORES, blocks_per_core),
            in_specs=[
                pl.BlockSpec(memory_space=pltpu.MemorySpace.SMEM),  # margin
                row_spec,  # anchor
                row_spec,  # positive
                row_spec,  # negative
            ],
            # Per-core partial-sum block, fully (8,128)-aligned -> unmasked vst.
            out_specs=pl.BlockSpec((1, 8, 128), lambda c, i: (c, 0, 0)),
        ),
        compiler_params=pltpu.CompilerParams(
            dimension_semantics=("parallel", "arbitrary"),
            vmem_limit_bytes=vmem_limit,
        ),
    )(margin_arr, anchor, positive, negative)

    # Each core's block holds its partial sum (replicated); combine + mean.
    return jnp.sum(out[:, 0, 0]) * (1.0 / B)


def _ref_triplet_loss(a, p, n, margin=1.0):
    a = a.astype(jnp.float32)
    p = p.astype(jnp.float32)
    n = n.astype(jnp.float32)
    dp = jnp.sqrt(jnp.sum((a - p + _EPS) ** 2, axis=-1))
    dn = jnp.sqrt(jnp.sum((a - n + _EPS) ** 2, axis=-1))
    return jnp.mean(jnp.maximum(dp - dn + margin, 0.0))


if __name__ == "__main__":
    key = jax.random.PRNGKey(0)

    # 1) Small f32 case (single block; core 1 gets a fully masked padded block).
    ka, kp, kn, key = jax.random.split(key, 4)
    B, D = 8, 32
    anchor = jax.random.normal(ka, (B, D), dtype=jnp.float32)
    positive = jax.random.normal(kp, (B, D), dtype=jnp.float32)
    negative = jax.random.normal(kn, (B, D), dtype=jnp.float32)
    loss = triplet_loss(anchor, positive, negative, margin=1.0)
    jax.block_until_ready(loss)
    expected = _ref_triplet_loss(anchor, positive, negative, margin=1.0)
    assert jnp.allclose(loss, expected, rtol=1e-5, atol=1e-5), (loss, expected)

    # 2) Ragged tiled case with explicit block_rows=8: batch=20 -> blocks
    #    (8,8,4)+1 fully padded block (exercises accumulator, ragged masking,
    #    clamped index_map for the padded block, 2-way core split).
    ka, kp, kn, key = jax.random.split(key, 4)
    B, D = 20, 32
    a2 = jax.random.normal(ka, (B, D), dtype=jnp.float32)
    p2 = jax.random.normal(kp, (B, D), dtype=jnp.float32)
    n2 = jax.random.normal(kn, (B, D), dtype=jnp.float32)
    loss2 = triplet_loss(a2, p2, n2, margin=0.5, block_rows=8)
    jax.block_until_ready(loss2)
    exp2 = _ref_triplet_loss(a2, p2, n2, margin=0.5)
    assert jnp.allclose(loss2, exp2, rtol=1e-5, atol=1e-5), (loss2, exp2)

    # 3) bf16 inputs with auto (16-row sublane-aligned) tiling, upcast in-kernel.
    ka, kp, kn, key = jax.random.split(key, 4)
    B, D = 16, 128
    a3 = jax.random.normal(ka, (B, D), dtype=jnp.bfloat16)
    p3 = jax.random.normal(kp, (B, D), dtype=jnp.bfloat16)
    n3 = jax.random.normal(kn, (B, D), dtype=jnp.bfloat16)
    loss3 = triplet_loss(a3, p3, n3, margin=1.0)
    jax.block_until_ready(loss3)
    exp3 = _ref_triplet_loss(a3, p3, n3, margin=1.0)
    assert jnp.allclose(loss3, exp3, rtol=1e-4, atol=1e-4), (loss3, exp3)

    # 4) Auto bytes-based tiling with a ragged split across the two cores.
    ka, kp, kn, key = jax.random.split(key, 4)
    B, D = 300, 64
    a4 = jax.random.normal(ka, (B, D), dtype=jnp.float32)
    p4 = jax.random.normal(kp, (B, D), dtype=jnp.float32)
    n4 = jax.random.normal(kn, (B, D), dtype=jnp.float32)
    loss4 = triplet_loss(a4, p4, n4, margin=1.0)
    jax.block_until_ready(loss4)
    exp4 = _ref_triplet_loss(a4, p4, n4, margin=1.0)
    assert jnp.allclose(loss4, exp4, rtol=1e-5, atol=1e-5), (loss4, exp4)

    print("KERNEL_OK")
</pallas_src>

<mosaic_0001>
module attributes {stable_mosaic.version = 11 : i64} {
  func.func @_triplet_loss_kernel(%arg0: i32, %arg1: i32, %arg2: memref<1xf32, #tpu.memory_space<smem>>, %arg3: memref<8x32xf32, #tpu.memory_space<vmem>>, %arg4: memref<8x32xf32, #tpu.memory_space<vmem>>, %arg5: memref<8x32xf32, #tpu.memory_space<vmem>>, %arg6: memref<1x8x128xf32, #tpu.memory_space<vmem>>) attributes {dimension_semantics = [#tpu.dimension_semantics<parallel>, #tpu.dimension_semantics<arbitrary>], iteration_bounds = array<i64: 2, 1>, scalar_prefetch = 0 : i64, scratch_operands = 0 : i64, tpu.core_type = #tpu.core_type<tc>, window_params = [{transform_indices = @transform_0, window_bounds = array<i64: 1>}, {transform_indices = @transform_1, window_bounds = array<i64: 8, 32>}, {transform_indices = @transform_2, window_bounds = array<i64: 8, 32>}, {transform_indices = @transform_3, window_bounds = array<i64: 8, 32>}, {transform_indices = @transform_4, window_bounds = array<i64: 1, 8, 128>}]} {
    %c0_i32 = arith.constant 0 : i32
    %0 = arith.cmpi eq, %arg1, %c0_i32 : i32
    %1 = arith.extui %0 : i1 to i32
    %c0_i32_0 = arith.constant 0 : i32
    %2 = arith.cmpi ne, %1, %c0_i32_0 : i32
    scf.if %2 {
      %cst_15 = arith.constant 0.000000e+00 : f32
      %34 = vector.broadcast %cst_15 : f32 to vector<1x8x128xf32>
      %c0_16 = arith.constant 0 : index
      %c0_17 = arith.constant 0 : index
      %c0_18 = arith.constant 0 : index
      %35 = vector.load %arg6[%c0_16, %c0_17, %c0_18] : memref<1x8x128xf32, #tpu.memory_space<vmem>>, vector<1x8x128xf32>
      tpu.vector_store %arg6[%c0_16, %c0_17, %c0_18], %34 {strides = array<i32>} : memref<1x8x128xf32, #tpu.memory_space<vmem>>, vector<1x8x128xf32>,
    } else {
    }
    %c0 = arith.constant 0 : index
    %c0_1 = arith.constant 0 : index
    %3 = vector.load %arg3[%c0, %c0_1] : memref<8x32xf32, #tpu.memory_space<vmem>>, vector<8x32xf32>
    %c0_2 = arith.constant 0 : index
    %c0_3 = arith.constant 0 : index
    %4 = vector.load %arg4[%c0_2, %c0_3] : memref<8x32xf32, #tpu.memory_space<vmem>>, vector<8x32xf32>
    %c0_4 = arith.constant 0 : index
    %c0_5 = arith.constant 0 : index
    %5 = vector.load %arg5[%c0_4, %c0_5] : memref<8x32xf32, #tpu.memory_space<vmem>>, vector<8x32xf32>
    %6 = arith.subf %3, %4 : vector<8x32xf32>
    %cst = arith.constant 9.99999997E-7 : f32
    %7 = vector.broadcast %cst : f32 to vector<8x32xf32>
    %8 = arith.addf %6, %7 : vector<8x32xf32>
    %9 = arith.mulf %8, %8 : vector<8x32xf32>
    %cst_6 = arith.constant dense<0.000000e+00> : vector<8xf32>
    %10 = vector.multi_reduction <add>, %9, %cst_6 [1] : vector<8x32xf32> to vector<8xf32>
    %11 = vector.shape_cast %10 : vector<8xf32> to vector<8x1xf32>
    %12 = math.sqrt %11 : vector<8x1xf32>
    %13 = arith.subf %3, %5 : vector<8x32xf32>
    %cst_7 = arith.constant 9.99999997E-7 : f32
    %14 = vector.broadcast %cst_7 : f32 to vector<8x32xf32>
    %15 = arith.addf %13, %14 : vector<8x32xf32>
    %16 = arith.mulf %15, %15 : vector<8x32xf32>
    %cst_8 = arith.constant dense<0.000000e+00> : vector<8xf32>
    %17 = vector.multi_reduction <add>, %16, %cst_8 [1] : vector<8x32xf32> to vector<8xf32>
    %18 = vector.shape_cast %17 : vector<8xf32> to vector<8x1xf32>
    %19 = math.sqrt %18 : vector<8x1xf32>
    %c0_9 = arith.constant 0 : index
    %20 = memref.load %arg2[%c0_9] : memref<1xf32, #tpu.memory_space<smem>>
    %21 = arith.subf %12, %19 : vector<8x1xf32>
    %22 = vector.broadcast %20 : f32 to vector<8x1xf32>
    %23 = arith.addf %21, %22 : vector<8x1xf32>
    %cst_10 = arith.constant 0.000000e+00 : f32
    %24 = vector.broadcast %cst_10 : f32 to vector<8x1xf32>
    %25 = arith.maximumf %23, %24 : vector<8x1xf32>
    %c1_i32 = arith.constant 1 : i32
    %26 = arith.muli %arg0, %c1_i32 : i32
    %27 = arith.addi %26, %arg1 : i32
    %c1_i32_11 = arith.constant 1 : i32
    %28 = arith.cmpi slt, %27, %c1_i32_11 : i32
    %29 = arith.extui %28 : i1 to i32
    %c0_i32_12 = arith.constant 0 : i32
    %30 = arith.cmpi ne, %29, %c0_i32_12 : i32
    scf.if %30 {
      %c0_15 = arith.constant 0 : index
      %c0_16 = arith.constant 0 : index
      %c0_17 = arith.constant 0 : index
      %34 = vector.load %arg6[%c0_15, %c0_16, %c0_17] : memref<1x8x128xf32, #tpu.memory_space<vmem>>, vector<1x8x128xf32>
      %35 = vector.shape_cast %25 : vector<8x1xf32> to vector<1x8x1xf32>
      %cst_18 = arith.constant dense<0.000000e+00> : vector<1xf32>
      %36 = vector.multi_reduction <add>, %35, %cst_18 [1, 2] : vector<1x8x1xf32> to vector<1xf32>
      %37 = vector.shape_cast %36 : vector<1xf32> to vector<1x1x1xf32>
      %38 = vector.extract %37[0, 0, 0] : f32 from vector<1x1x1xf32>
      %39 = vector.broadcast %38 : f32 to vector<1x8x128xf32>
      %40 = arith.addf %34, %39 : vector<1x8x128xf32>
      %c0_19 = arith.constant 0 : index
      %c0_20 = arith.constant 0 : index
      %c0_21 = arith.constant 0 : index
      %41 = vector.load %arg6[%c0_19, %c0_20, %c0_21] : memref<1x8x128xf32, #tpu.memory_space<vmem>>, vector<1x8x128xf32>
      tpu.vector_store %arg6[%c0_19, %c0_20, %c0_21], %40 {strides = array<i32>} : memref<1x8x128xf32, #tpu.memory_space<vmem>>, vector<1x8x128xf32>,
    } else {
    }
    %c1_i32_13 = arith.constant 1 : i32
    %31 = arith.cmpi sge, %27, %c1_i32_13 : i32
    %32 = arith.extui %31 : i1 to i32
    %c0_i32_14 = arith.constant 0 : i32
    %33 = arith.cmpi ne, %32, %c0_i32_14 : i32
    scf.if %33 {
      %c8_i32 = arith.constant 8 : i32
      %34 = arith.muli %27, %c8_i32 : i32
      %35 = tpu.iota {dimensions = array<i32: 0>} : vector<8x1xi32>
      %36 = vector.broadcast %34 : i32 to vector<8x1xi32>
      %37 = arith.addi %36, %35 : vector<8x1xi32>
      %c8_i32_15 = arith.constant 8 : i32
      %38 = vector.broadcast %c8_i32_15 : i32 to vector<8x1xi32>
      %39 = arith.cmpi slt, %37, %38 : vector<8x1xi32>
      %cst_16 = arith.constant 0.000000e+00 : f32
      %40 = vector.broadcast %cst_16 : f32 to vector<8x1xf32>
      %41 = arith.select %39, %25, %40 : vector<8x1xi1>, vector<8x1xf32>
      %c0_17 = arith.constant 0 : index
      %c0_18 = arith.constant 0 : index
      %c0_19 = arith.constant 0 : index
      %42 = vector.load %arg6[%c0_17, %c0_18, %c0_19] : memref<1x8x128xf32, #tpu.memory_space<vmem>>, vector<1x8x128xf32>
      %43 = vector.shape_cast %41 : vector<8x1xf32> to vector<1x8x1xf32>
      %cst_20 = arith.constant dense<0.000000e+00> : vector<1xf32>
      %44 = vector.multi_reduction <add>, %43, %cst_20 [1, 2] : vector<1x8x1xf32> to vector<1xf32>
      %45 = vector.shape_cast %44 : vector<1xf32> to vector<1x1x1xf32>
      %46 = vector.extract %45[0, 0, 0] : f32 from vector<1x1x1xf32>
      %47 = vector.broadcast %46 : f32 to vector<1x8x128xf32>
      %48 = arith.addf %42, %47 : vector<1x8x128xf32>
      %c0_21 = arith.constant 0 : index
      %c0_22 = arith.constant 0 : index
      %c0_23 = arith.constant 0 : index
      %49 = vector.load %arg6[%c0_21, %c0_22, %c0_23] : memref<1x8x128xf32, #tpu.memory_space<vmem>>, vector<1x8x128xf32>
      tpu.vector_store %arg6[%c0_21, %c0_22, %c0_23], %48 {strides = array<i32>} : memref<1x8x128xf32, #tpu.memory_space<vmem>>, vector<1x8x128xf32>,
    } else {
    }
    return
  }
  func.func @transform_0(%arg0: i32, %arg1: i32) -> i32 {
    %c0_i32 = arith.constant 0 : i32
    %c0_i32_0 = arith.constant 0 : i32
    return %c0_i32 : i32
  }
  func.func @transform_1(%arg0: i32, %arg1: i32) -> (i32, i32) {
    %c1_i32 = arith.constant 1 : i32
    %0 = arith.muli %arg0, %c1_i32 : i32
    %1 = arith.addi %0, %arg1 : i32
    %c0_i32 = arith.constant 0 : i32
    %2 = arith.minsi %1, %c0_i32 : i32
    %c0_i32_0 = arith.constant 0 : i32
    %c0_i32_1 = arith.constant 0 : i32
    return %2, %c0_i32_0 : i32, i32
  }
  func.func @transform_2(%arg0: i32, %arg1: i32) -> (i32, i32) {
    %c1_i32 = arith.constant 1 : i32
    %0 = arith.muli %arg0, %c1_i32 : i32
    %1 = arith.addi %0, %arg1 : i32
    %c0_i32 = arith.constant 0 : i32
    %2 = arith.minsi %1, %c0_i32 : i32
    %c0_i32_0 = arith.constant 0 : i32
    %c0_i32_1 = arith.constant 0 : i32
    return %2, %c0_i32_0 : i32, i32
  }
  func.func @transform_3(%arg0: i32, %arg1: i32) -> (i32, i32) {
    %c1_i32 = arith.constant 1 : i32
    %0 = arith.muli %arg0, %c1_i32 : i32
    %1 = arith.addi %0, %arg1 : i32
    %c0_i32 = arith.constant 0 : i32
    %2 = arith.minsi %1, %c0_i32 : i32
    %c0_i32_0 = arith.constant 0 : i32
    %c0_i32_1 = arith.constant 0 : i32
    return %2, %c0_i32_0 : i32, i32
  }
  func.func @transform_4(%arg0: i32, %arg1: i32) -> (i32, i32, i32) {
    %c0_i32 = arith.constant 0 : i32
    %c0_i32_0 = arith.constant 0 : i32
    %c0_i32_1 = arith.constant 0 : i32
    return %arg0, %c0_i32, %c0_i32_0 : i32, i32, i32
  }
}

</mosaic_0001>

<llo_original>
// kernel: tpu_custom_call.1
$region0: #{tpu_custom_call.1}
  #allocation0 [shape = 'u32[]', space=smem, size = 0x4, offset = 0x4, fixed_abs, tag = 'smem constant byte address 0x4 - core index']
  #allocation1 [shape = 'u32[72,128]{1,0:T(1,128)}', space=vmem, size = 0x9000, scoped, tag = 'internal scratch']
  #allocation2 [shape = 'f32[1]{0:T(128)S(6)}', space=smem, size = 0x200, scoped, tag = 'scoped memory for tpu_custom_call.1']
  %s0 = inlined_call_operand.<no memory space> [shape: f32[1], index: 0, kind: input, shape index: {}]
  %s1 = inlined_call_operand.hbm [shape: f32[8,32], index: 1, kind: input, shape index: {}]
  %s2 = inlined_call_operand.hbm [shape: f32[8,32], index: 2, kind: input, shape index: {}]
  %s3 = inlined_call_operand.hbm [shape: f32[8,32], index: 3, kind: input, shape index: {}]
  %s4 = inlined_call_operand.hbm [shape: f32[2,8,128], index: 4, kind: output, shape index: {}]
  %s5 = sld [smem:[#allocation0]]
  $region73: #{tpu_custom_call.1} parent=0
    _
  %s7 = ssub.s32 1, %s5
  %s8 = scalar_select 0, %s7, %s5
  %9 = sst [smem:[#allocation2]] %s0
  $region1: #{tpu_custom_call.1} parent=0
    #allocation3 [shape = 'u8[8192]{0}', space=vmem, size = 0x2000, scoped, tag = 'input window, operand 1']
    #allocation4 [shape = 's32[2]{0}', space=sflag, size = 0x8, scoped, tag = 'scoped memory for tpu_custom_call.1']
    #allocation5 [shape = 's32[2]{0}', space=sflag, size = 0x8, scoped, tag = 'scoped memory for tpu_custom_call.1']
    #allocation6 [shape = 'u8[8192]{0}', space=vmem, size = 0x2000, scoped, tag = 'input window, operand 2']
    #allocation7 [shape = 's32[2]{0}', space=sflag, size = 0x8, scoped, tag = 'scoped memory for tpu_custom_call.1']
    #allocation8 [shape = 'u8[8192]{0}', space=vmem, size = 0x2000, scoped, tag = 'input window, operand 3']
    #allocation9 [shape = 'u8[8192]{0}', space=vmem, size = 0x2000, scoped, tag = 'output window, operand 0']
    %10 = vsyncpa [#allocation4], 0
    %s11 = scalar_lea.sflag [#allocation4], 1
    %12 = vsyncpa %s11, 0
    %13 = vsyncpa [#allocation7], 0
    %s14 = scalar_lea.sflag [#allocation7], 1
    %15 = vsyncpa %s14, 0
    %16 = vsyncpa [#allocation5], 0
    %s17 = scalar_lea.sflag [#allocation5], 1
    %18 = vsyncpa %s17, 0
    loop: start=0, step=1, limit=4
    $region2: #{tpu_custom_call.1} parent=1 // loop_pre_header
      _
    $region3: #{tpu_custom_call.1} parent=1 // loop_header
      %s20 = sphi 0, %s24
      %p21 = scmp.ge.s32.totalorder %s20, 4
      %s27 = sphi 0, %s39
      %s28 = sphi 0, %s35
      %s29 = sphi 0, %s27
      %s30 = sphi 0, %s28
      %s31 = sphi 0, %s29
      %s32 = sphi 0, %s30
      %s40 = sphi 0, %s40
      %s42 = sphi 0, %s40
      %s43 = sphi 0, %s42
      %s57 = sphi 0, %s43
      %s69 = sphi 0, %s71
      %s72 = sphi 0, %s69
      %s73 = sphi 0, %s72
      %s89 = sphi 0, %s73
      %s101 = sphi 0, %s103
      %s104 = sphi 0, %s101
      %s105 = sphi 0, %s104
      %s121 = sphi 0, %s105
      %s133 = sphi 0, %s135
      %s136 = sphi 0, %s133
      %s137 = sphi 0, %s136
      %s153 = sphi 0, %s137
      %s159 = sphi 0, %s161
      %s162 = sphi 0, %s159
      %s163 = sphi 0, %s162
      %s179 = sphi 0, %s163
    $region4: #{tpu_custom_call.1} parent=1 // loop_header_branch
      %23 = sbr.rel (%p21) target = $region8
    $region5: #{tpu_custom_call.1} parent=1 // loop_body
      %s25 = ssub.s32 %s20, 1
      %s26 = ssub.s32 %s20, 2
      %s33 = sadd.s32 1, %s28
      %p34 = scmp.ge.s32.totalorder %s33, 1
      %s35 = scalar_select %p34, 0, %s33
      %s36 = sadd.s32 1, %s27
      %s37 = scalar_select %p34, %s36, %s27
      %p38 = scmp.ge.s32.totalorder %s37, 2
      %s39 = scalar_select %p38, 0, %s37
      %s41 = sadd.s32 %s40, 1
      %p44 = scmp.eq.s32.totalorder %s20, 1
      %p45 = scmp.ne.s32.totalorder %s40, %s42
      %p46 = scmp.eq.s32.totalorder %s20, 0
      %p47 = por %p45, %p46
      %p48 = scmp.ne.s32.totalorder %s40, %s42
      %p49 = scmp.eq.s32.totalorder %s25, 1
      %p50 = por %p48, %p49
      %p51 = scmp.ne.s32.totalorder %s42, %s43
      %p52 = scmp.eq.s32.totalorder %s25, 0
      %p53 = por %p51, %p52
      %p54 = scmp.ne.s32.totalorder %s42, %s43
      %p55 = scmp.eq.s32.totalorder %s26, 1
      %p56 = por %p54, %p55
      %p58 = scmp.ne.s32.totalorder %s43, %s57
      %p59 = scmp.eq.s32.totalorder %s26, 0
      %p60 = por %p58, %p59
      %s61 = sadd.s32 %s27, %s28
      %p62 = scmp.lt.s32.totalorder %s61, 0
      %s63 = scalar_select %p62, %s61, 0
      %s64 = sadd.s32 %s39, %s35
      %p65 = scmp.lt.s32.totalorder %s64, 0
      %s66 = scalar_select %p65, %s64, 0
      %s67 = ssub.s32 %s63, %s66
      %p68 = scmp.eq.s32.totalorder %s67, 0
      %s70 = sadd.s32 %s69, 1
      %s71 = scalar_select %p68, %s69, %s70
      %p74 = pneg %p68
      %p75 = scmp.eq.s32.totalorder %s20, 1
      %p76 = por %p74, %p75
      %p77 = scmp.ne.s32.totalorder %s69, %s72
      %p78 = scmp.eq.s32.totalorder %s20, 0
      %p79 = por %p77, %p78
      %p80 = scmp.ne.s32.totalorder %s69, %s72
      %p81 = scmp.eq.s32.totalorder %s25, 1
      %p82 = por %p80, %p81
      %p83 = scmp.ne.s32.totalorder %s72, %s73
      %p84 = scmp.eq.s32.totalorder %s25, 0
      %p85 = por %p83, %p84
      %p86 = scmp.ne.s32.totalorder %s72, %s73
      %p87 = scmp.eq.s32.totalorder %s26, 1
      %p88 = por %p86, %p87
      %p90 = scmp.ne.s32.totalorder %s73, %s89
      %p91 = scmp.eq.s32.totalorder %s26, 0
      %p92 = por %p90, %p91
      %s93 = sadd.s32 %s27, %s28
      %p94 = scmp.lt.s32.totalorder %s93, 0
      %s95 = scalar_select %p94, %s93, 0
      %s96 = sadd.s32 %s39, %s35
      %p97 = scmp.lt.s32.totalorder %s96, 0
      %s98 = scalar_select %p97, %s96, 0
      %s99 = ssub.s32 %s95, %s98
      %p100 = scmp.eq.s32.totalorder %s99, 0
      %s102 = sadd.s32 %s101, 1
      %s103 = scalar_select %p100, %s101, %s102
      %p106 = pneg %p100
      %p107 = scmp.eq.s32.totalorder %s20, 1
      %p108 = por %p106, %p107
      %p109 = scmp.ne.s32.totalorder %s101, %s104
      %p110 = scmp.eq.s32.totalorder %s20, 0
      %p111 = por %p109, %p110
      %p112 = scmp.ne.s32.totalorder %s101, %s104
      %p113 = scmp.eq.s32.totalorder %s25, 1
      %p114 = por %p112, %p113
      %p115 = scmp.ne.s32.totalorder %s104, %s105
      %p116 = scmp.eq.s32.totalorder %s25, 0
      %p117 = por %p115, %p116
      %p118 = scmp.ne.s32.totalorder %s104, %s105
      %p119 = scmp.eq.s32.totalorder %s26, 1
      %p120 = por %p118, %p119
      %p122 = scmp.ne.s32.totalorder %s105, %s121
      %p123 = scmp.eq.s32.totalorder %s26, 0
      %p124 = por %p122, %p123
      %s125 = sadd.s32 %s27, %s28
      %p126 = scmp.lt.s32.totalorder %s125, 0
      %s127 = scalar_select %p126, %s125, 0
      %s128 = sadd.s32 %s39, %s35
      %p129 = scmp.lt.s32.totalorder %s128, 0
      %s130 = scalar_select %p129, %s128, 0
      %s131 = ssub.s32 %s127, %s130
      %p132 = scmp.eq.s32.totalorder %s131, 0
      %s134 = sadd.s32 %s133, 1
      %s135 = scalar_select %p132, %s133, %s134
      %p138 = pneg %p132
      %p139 = scmp.eq.s32.totalorder %s20, 1
      %p140 = por %p138, %p139
      %p141 = scmp.ne.s32.totalorder %s133, %s136
      %p142 = scmp.eq.s32.totalorder %s20, 0
      %p143 = por %p141, %p142
      %p144 = scmp.ne.s32.totalorder %s133, %s136
      %p145 = scmp.eq.s32.totalorder %s25, 1
      %p146 = por %p144, %p145
      %p147 = scmp.ne.s32.totalorder %s136, %s137
      %p148 = scmp.eq.s32.totalorder %s25, 0
      %p149 = por %p147, %p148
      %p150 = scmp.ne.s32.totalorder %s136, %s137
      %p151 = scmp.eq.s32.totalorder %s26, 1
      %p152 = por %p150, %p151
      %p154 = scmp.ne.s32.totalorder %s137, %s153
      %p155 = scmp.eq.s32.totalorder %s26, 0
      %p156 = por %p154, %p155
      %s157 = ssub.s32 %s27, %s39
      %p158 = scmp.eq.s32.totalorder %s157, 0
      %s160 = sadd.s32 %s159, 1
      %s161 = scalar_select %p158, %s159, %s160
      %p164 = pneg %p158
      %p165 = scmp.eq.s32.totalorder %s20, 1
      %p166 = por %p164, %p165
      %p167 = scmp.ne.s32.totalorder %s159, %s162
      %p168 = scmp.eq.s32.totalorder %s20, 0
      %p169 = por %p167, %p168
      %p170 = scmp.ne.s32.totalorder %s159, %s162
      %p171 = scmp.eq.s32.totalorder %s25, 1
      %p172 = por %p170, %p171
      %p173 = scmp.ne.s32.totalorder %s162, %s163
      %p174 = scmp.eq.s32.totalorder %s25, 0
      %p175 = por %p173, %p174
      %p176 = scmp.ne.s32.totalorder %s162, %s163
      %p177 = scmp.eq.s32.totalorder %s26, 1
      %p178 = por %p176, %p177
      %p180 = scmp.ne.s32.totalorder %s163, %s179
      %p181 = scmp.eq.s32.totalorder %s26, 0
      %p182 = por %p180, %p181
      %p183 = scmp.le.s32.totalorder 1, %s20
      %p184 = scmp.lt.s32.totalorder %s20, 3
      %p185 = pnand %p183, %p184
      %p186 = pneg %p185
      // Predicated region
      $region9: #{tpu_custom_call.1} parent=5 // pred_check
        _
      $region10: #{tpu_custom_call.1} parent=5 // pred_check_branch
        %188 = sbr.rel (%p185) target = $region12
      $region11: #{tpu_custom_call.1} parent=5 // pred_region
        %s189 = ssub.s32 %s20, 1
        // Predicated region
        $region13: #{tpu_custom_call.1} parent=11 // pred_check
          %p190 = pneg %p53
        $region14: #{tpu_custom_call.1} parent=11 // pred_check_branch
          %192 = sbr.rel (%p190) target = $region16
        $region15: #{tpu_custom_call.1} parent=11 // pred_region
          _
        $region16: #{tpu_custom_call.1} parent=11 // pred_fallthru
          _
      $region12: #{tpu_custom_call.1} parent=5 // pred_fallthru
        _
      %p193 = scmp.lt.s32.totalorder %s20, 2
      // Predicated region
      $region17: #{tpu_custom_call.1} parent=5 // pred_check
        %p194 = pneg %p193
      $region18: #{tpu_custom_call.1} parent=5 // pred_check_branch
        %196 = sbr.rel (%p194) target = $region20
      $region19: #{tpu_custom_call.1} parent=5 // pred_region
        // Predicated region
        $region21: #{tpu_custom_call.1} parent=19 // pred_check
          %p197 = pneg %p79
        $region22: #{tpu_custom_call.1} parent=19 // pred_check_branch
          %199 = sbr.rel (%p197) target = $region24
        $region23: #{tpu_custom_call.1} parent=19 // pred_region
          %s200 = sand.u32 %s69, 1
          %s201 = scalar_lea.sflag [#allocation4], %s200
          %s202 = sand.u32 %s69, 1
          %s203 = smul.addr %s202, 8
          %s204 = scalar_lea.vmem [#allocation3], %s203
          %s205 = sadd.s32 %s27, %s28
          %p206 = scmp.lt.s32.totalorder %s205, 0
          %s207 = scalar_select %p206, %s205, 0
          %209 = vsyncadd %s201, 0
          %s210 = smul.addr %s207, 8
          %s211 = scalar_lea.hbm %s1, %s210
          %s213 = sshll.u32 %s211, 4
          %s214 = int_to_ptr.hbm [resolvable:$true] %s213
          %s215 = sshll.u32 %s204, 4
          %s216 = int_to_ptr.vmem [resolvable:$true] %s215
          %218 = dma.hbm_to_vmem [thread:$0]  %s214, 128, %s216, %s201
        $region24: #{tpu_custom_call.1} parent=19 // pred_fallthru
          _
        // Predicated region
        $region25: #{tpu_custom_call.1} parent=19 // pred_check
          %p219 = pneg %p111
        $region26: #{tpu_custom_call.1} parent=19 // pred_check_branch
          %221 = sbr.rel (%p219) target = $region28
        $region27: #{tpu_custom_call.1} parent=19 // pred_region
          %s222 = sand.u32 %s20, 1
          %s223 = scalar_lea.sflag [#allocation7], %s222
          %s224 = sand.u32 %s101, 1
          %s225 = smul.addr %s224, 8
          %s226 = scalar_lea.vmem [#allocation6], %s225
          %s227 = sadd.s32 %s27, %s28
          %p228 = scmp.lt.s32.totalorder %s227, 0
          %s229 = scalar_select %p228, %s227, 0
          %231 = vsyncadd %s223, 0
          %s232 = smul.addr %s229, 8
          %s233 = scalar_lea.hbm %s2, %s232
          %s235 = sshll.u32 %s233, 4
          %s236 = int_to_ptr.hbm [resolvable:$true] %s235
          %s237 = sshll.u32 %s226, 4
          %s238 = int_to_ptr.vmem [resolvable:$true] %s237
          %240 = dma.hbm_to_vmem [thread:$0]  %s236, 128, %s238, %s223
        $region28: #{tpu_custom_call.1} parent=19 // pred_fallthru
          _
        // Predicated region
        $region29: #{tpu_custom_call.1} parent=19 // pred_check
          %p241 = pneg %p143
        $region30: #{tpu_custom_call.1} parent=19 // pred_check_branch
          %243 = sbr.rel (%p241) target = $region32
        $region31: #{tpu_custom_call.1} parent=19 // pred_region
          %s244 = sand.u32 %s20, 1
          %s245 = scalar_lea.sflag [#allocation7], %s244
          %s246 = sand.u32 %s133, 1
          %s247 = smul.addr %s246, 8
          %s248 = scalar_lea.vmem [#allocation8], %s247
          %s249 = sadd.s32 %s27, %s28
          %p250 = scmp.lt.s32.totalorder %s249, 0
          %s251 = scalar_select %p250, %s249, 0
          %253 = vsyncadd %s245, 0
          %s254 = smul.addr %s251, 8
          %s255 = scalar_lea.hbm %s3, %s254
          %s257 = sshll.u32 %s255, 4
          %s258 = int_to_ptr.hbm [resolvable:$true] %s257
          %s259 = sshll.u32 %s248, 4
          %s260 = int_to_ptr.vmem [resolvable:$true] %s259
          %262 = dma.hbm_to_vmem [thread:$0]  %s258, 128, %s260, %s245
        $region32: #{tpu_custom_call.1} parent=19 // pred_fallthru
          _
      $region20: #{tpu_custom_call.1} parent=5 // pred_fallthru
        _
      %p263 = scmp.le.s32.totalorder 1, %s20
      %p264 = scmp.lt.s32.totalorder %s20, 3
      %p265 = pnand %p263, %p264
      %p266 = pneg %p265
      // Predicated region
      $region33: #{tpu_custom_call.1} parent=5 // pred_check
        _
      $region34: #{tpu_custom_call.1} parent=5 // pred_check_branch
        %268 = sbr.rel (%p265) target = $region36
      $region35: #{tpu_custom_call.1} parent=5 // pred_region
        %s269 = ssub.s32 %s20, 1
        %s270 = sand.u32 %s72, 1
        %s271 = scalar_lea.sflag [#allocation4], %s270
        %s272 = sand.u32 %s72, 1
        %s273 = smul.addr %s272, 8
        %s274 = scalar_lea.vmem [#allocation3], %s273
        // Predicated region
        $region37: #{tpu_custom_call.1} parent=35 // pred_check
          %p275 = pneg %p85
        $region38: #{tpu_custom_call.1} parent=35 // pred_check_branch
          %277 = sbr.rel (%p275) target = $region40
        $region39: #{tpu_custom_call.1} parent=35 // pred_region
          %279 = dma.done %s271, 128
        $region40: #{tpu_custom_call.1} parent=35 // pred_fallthru
          _
        %s280 = sand.u32 %s25, 1
        %s281 = scalar_lea.sflag [#allocation7], %s280
        %s282 = sand.u32 %s104, 1
        %s283 = smul.addr %s282, 8
        %s284 = scalar_lea.vmem [#allocation6], %s283
        // Predicated region
        $region41: #{tpu_custom_call.1} parent=35 // pred_check
          %p285 = pneg %p117
        $region42: #{tpu_custom_call.1} parent=35 // pred_check_branch
          %287 = sbr.rel (%p285) target = $region44
        $region43: #{tpu_custom_call.1} parent=35 // pred_region
          %289 = dma.done %s281, 128
        $region44: #{tpu_custom_call.1} parent=35 // pred_fallthru
          _
        %s290 = sand.u32 %s25, 1
        %s291 = scalar_lea.sflag [#allocation7], %s290
        %s292 = sand.u32 %s136, 1
        %s293 = smul.addr %s292, 8
        %s294 = scalar_lea.vmem [#allocation8], %s293
        // Predicated region
        $region45: #{tpu_custom_call.1} parent=35 // pred_check
          %p295 = pneg %p149
        $region46: #{tpu_custom_call.1} parent=35 // pred_check_branch
          %297 = sbr.rel (%p295) target = $region48
        $region47: #{tpu_custom_call.1} parent=35 // pred_region
          %299 = dma.done %s291, 128
        $region48: #{tpu_custom_call.1} parent=35 // pred_fallthru
          _
        %p300 = pneg %p53
        %p301 = pneg %p50
        %s302 = sand.u32 %s72, 1
        %s303 = scalar_lea.sflag [#allocation4], %s302
        %s304 = sand.u32 %s72, 1
        %s305 = smul.addr %s304, 8
        %s306 = scalar_lea.vmem [#allocation3], %s305
        %p307 = pneg %p85
        %p308 = pneg %p82
        %s309 = sand.u32 %s25, 1
        %s310 = scalar_lea.sflag [#allocation7], %s309
        %s311 = sand.u32 %s104, 1
        %s312 = smul.addr %s311, 8
        %s313 = scalar_lea.vmem [#allocation6], %s312
        %p314 = pneg %p117
        %p315 = pneg %p114
        %s316 = sand.u32 %s25, 1
        %s317 = scalar_lea.sflag [#allocation7], %s316
        %s318 = sand.u32 %s136, 1
        %s319 = smul.addr %s318, 8
        %s320 = scalar_lea.vmem [#allocation8], %s319
        %p321 = pneg %p149
        %p322 = pneg %p146
        %p323 = pneg %p175
        %p324 = pneg %p172
        %s325 = sand.u32 %s162, 1
        %s326 = scalar_lea.sflag [#allocation5], %s325
        %s327 = sand.u32 %s162, 1
        %s328 = smul.addr %s327, 8
        %s329 = scalar_lea.vmem [#allocation9], %s328
        %s330 = sadd.s32 %s29, %s30
        %p331 = scmp.lt.s32.totalorder %s330, 0
        %s332 = scalar_select %p331, %s330, 0
        %s333 = sadd.s32 %s29, %s30
        %p334 = scmp.lt.s32.totalorder %s333, 0
        %s335 = scalar_select %p334, %s333, 0
        %s336 = sadd.s32 %s29, %s30
        %p337 = scmp.lt.s32.totalorder %s336, 0
        %s338 = scalar_select %p337, %s336, 0
        %p339 = scmp.eq.s32.totalorder %s30, 0
        // Predicated region
        $region49: #{tpu_custom_call.1} parent=35 // pred_check
          %p340 = pneg %p339
        $region50: #{tpu_custom_call.1} parent=35 // pred_check_branch
          %342 = sbr.rel (%p340) target = $region52
        $region51: #{tpu_custom_call.1} parent=35 // pred_region
          %343 = vst [vmem:[%s329] sm:$0xff] 0.0
        $region52: #{tpu_custom_call.1} parent=35 // pred_fallthru
          _
        %v344 = vld [vmem:[%s274] sm:$0xff]
        %v345 = vld [vmem:[%s284] sm:$0xff]
        %v346 = vld [vmem:[%s294] sm:$0xff]
        %v347 = vsub.f32 %v344, %v345
        %v348 = vadd.f32 %v347, 1e-06
        %v349 = vmul.f32 %v348, %v348
        %vm350 = vcmask 261120
        %v351 = vsel %vm350, %v349, 0.0
        %352 = vadd.xlane.f32.xlu0 %v351
        %v353 = vpop.xlane.xlu0 %352
        %v354 = vrsqrt.pop %v353
        %v355 = vmul.f32 %v354, %v353
        %v356 = vmul.f32 %v355, %v354
        %v357 = vmul.f32 0.5, %v356
        %v358 = vsub.f32 1.5, %v357
        %v359 = vmul.f32 %v354, %v358
        %v360 = vmul.f32 %v353, %v359
        %vm361 = vcmp.eq.f32.partialorder %v353, inf
        %v362 = vsel %vm361, %v353, %v360
        %vm363 = vcmp.eq.f32.partialorder %v353, 0.0
        %v364 = vand.u32 %v353, 2147483648
        %v365 = vsel %vm363, %v364, %v362
        %v366 = vsub.f32 %v344, %v346
        %v367 = vadd.f32 %v366, 1e-06
        %v368 = vmul.f32 %v367, %v367
        %v369 = vsel %vm350, %v368, 0.0
        %370 = vadd.xlane.f32.xlu0 %v369
        %v371 = vpop.xlane.xlu0 %370
        %v372 = vrsqrt.pop %v371
        %v373 = vmul.f32 %v372, %v371
        %v374 = vmul.f32 %v373, %v372
        %v375 = vmul.f32 0.5, %v374
        %v376 = vsub.f32 1.5, %v375
        %v377 = vmul.f32 %v372, %v376
        %v378 = vmul.f32 %v371, %v377
        %vm379 = vcmp.eq.f32.partialorder %v371, inf
        %v380 = vsel %vm379, %v371, %v378
        %vm381 = vcmp.eq.f32.partialorder %v371, 0.0
        %v382 = vand.u32 %v371, 2147483648
        %v383 = vsel %vm381, %v382, %v380
        %s384 = sld [smem:[#allocation2]]
        %v385 = vsub.f32 %v365, %v383
        %v386 = vstv %s384
        %v387 = vadd.f32 %v385, %v386
        %v388 = vmax.f32 %v387, 0.0
        %s389 = sadd.s32 %s29, %s30
        %p390 = scmp.lt.s32.totalorder %s389, 1
        // Predicated region
        $region53: #{tpu_custom_call.1} parent=35 // pred_check
          %p391 = pneg %p390
        $region54: #{tpu_custom_call.1} parent=35 // pred_check_branch
          %393 = sbr.rel (%p391) target = $region56
        $region55: #{tpu_custom_call.1} parent=35 // pred_region
          %v394 = vld [vmem:[%s329] sm:$0xff]
          %vm395 = vcmask 7168
          %v396 = vsel %vm395, %v388, 0.0
          %397 = vadd.xlane.f32.xlu0 %v396
          %v398 = vpop.xlane.xlu0 %397
          %v399 = vrot.slane %v398, 4
          %v400 = vadd.f32 %v398, %v399
          %v401 = vrot.slane %v400, 2
          %v402 = vadd.f32 %v400, %v401
          %v403 = vrot.slane %v402, 1
          %v404 = vadd.f32 %v402, %v403
          %s405 = vtos %v404
          %v406 = vstv %s405
          %v407 = vadd.f32 %v394, %v406
          %408 = vst [vmem:[%s329] sm:$0xff] %v407
        $region56: #{tpu_custom_call.1} parent=35 // pred_fallthru
          _
        %p409 = scmp.ge.s32.totalorder %s389, 1
        // Predicated region
        $region57: #{tpu_custom_call.1} parent=35 // pred_check
          %p410 = pneg %p409
        $region58: #{tpu_custom_call.1} parent=35 // pred_check_branch
          %412 = sbr.rel (%p410) target = $region60
        $region59: #{tpu_custom_call.1} parent=35 // pred_region
          %s413 = smul.u32 %s389, 8
          %v414 = vlaneseq
          %v415 = vshrl.u32 %v414, 7
          %v416 = vstv %s413
          %v417 = vadd.s32 %v416, %v415
          %vm418 = vcmp.lt.s32.totalorder %v417, 8
          %v419 = vsel %vm418, %v388, 0.0
          %v420 = vld [vmem:[%s329] sm:$0xff]
          %vm421 = vcmask 7168
          %v422 = vsel %vm421, %v419, 0.0
          %423 = vadd.xlane.f32.xlu0 %v422
          %v424 = vpop.xlane.xlu0 %423
          %v425 = vrot.slane %v424, 4
          %v426 = vadd.f32 %v424, %v425
          %v427 = vrot.slane %v426, 2
          %v428 = vadd.f32 %v426, %v427
          %v429 = vrot.slane %v428, 1
          %v430 = vadd.f32 %v428, %v429
          %s431 = vtos %v430
          %v432 = vstv %s431
          %v433 = vadd.f32 %v420, %v432
          %434 = vst [vmem:[%s329] sm:$0xff] %v433
        $region60: #{tpu_custom_call.1} parent=35 // pred_fallthru
          _
        %s435 = sand.u32 %s162, 1
        %s436 = scalar_lea.sflag [#allocation5], %s435
        %s437 = sand.u32 %s162, 1
        %s438 = smul.addr %s437, 8
        %s439 = scalar_lea.vmem [#allocation9], %s438
        // Predicated region
        $region61: #{tpu_custom_call.1} parent=35 // pred_check
          %p440 = pneg %p172
        $region62: #{tpu_custom_call.1} parent=35 // pred_check_branch
          %442 = sbr.rel (%p440) target = $region64
        $region63: #{tpu_custom_call.1} parent=35 // pred_region
          %444 = vsyncadd %s436, 0
          %s445 = smul.addr %s29, 8
          %s446 = scalar_lea.hbm %s4, %s445
          %s448 = sshll.u32 %s439, 4
          %s449 = int_to_ptr.vmem [resolvable:$true] %s448
          %s450 = sshll.u32 %s446, 4
          %s451 = int_to_ptr.hbm [resolvable:$true] %s450
          %453 = dma.vmem_to_hbm [thread:$0]  %s449, 128, %s451, %s436
        $region64: #{tpu_custom_call.1} parent=35 // pred_fallthru
          _
      $region36: #{tpu_custom_call.1} parent=5 // pred_fallthru
        _
      %p454 = scmp.le.s32.totalorder 2, %s20
      // Predicated region
      $region65: #{tpu_custom_call.1} parent=5 // pred_check
        %p455 = pneg %p454
      $region66: #{tpu_custom_call.1} parent=5 // pred_check_branch
        %457 = sbr.rel (%p455) target = $region68
      $region67: #{tpu_custom_call.1} parent=5 // pred_region
        %s458 = ssub.s32 %s20, 2
        // Predicated region
        $region69: #{tpu_custom_call.1} parent=67 // pred_check
          %p459 = pneg %p178
        $region70: #{tpu_custom_call.1} parent=67 // pred_check_branch
          %461 = sbr.rel (%p459) target = $region72
        $region71: #{tpu_custom_call.1} parent=67 // pred_region
          %s462 = sand.u32 %s163, 1
          %s463 = scalar_lea.sflag [#allocation5], %s462
          %s464 = sand.u32 %s163, 1
          %s465 = smul.addr %s464, 8
          %s466 = scalar_lea.vmem [#allocation9], %s465
          %468 = dma.done %s463, 128
        $region72: #{tpu_custom_call.1} parent=67 // pred_fallthru
          _
      $region68: #{tpu_custom_call.1} parent=5 // pred_fallthru
        _
    $region6: #{tpu_custom_call.1} parent=1 // loop_footer
      %s24 = sadd.s32 1, %s20
    $region7: #{tpu_custom_call.1} parent=1 // loop_footer_branch
      %19 = sbr.rel target = $region3
    $region8: #{tpu_custom_call.1} parent=1 // loop_exit
      _
    %469 = vsyncpa [#allocation4], 1
    %s470 = scalar_lea.sflag [#allocation4], 1
    %471 = vsyncpa %s470, 1
    %472 = vsyncpa [#allocation7], 1
    %s473 = scalar_lea.sflag [#allocation7], 1
    %474 = vsyncpa %s473, 1
    %475 = vsyncpa [#allocation5], 1
    %s476 = scalar_lea.sflag [#allocation5], 1
    %477 = vsyncpa %s476, 1

</llo_original>
